<compile_context>
chip_gen: v5e
topology: v5e:2x2
jax: 0.10.0
libtpu: 0.0.40
codegen_flags: <defaults>
</compile_context>

<pallas_src>
import functools

import jax
import jax.numpy as jnp
from jax.experimental import pallas as pl
from jax.experimental.pallas import tpu as pltpu

K_LOGICAL = 784          # 28*28, fc1 input features
K_PAD = 896              # 7 * 128, MXU/lane aligned
H_DIM = 128              # fc1 output features
N_LOGICAL = 10           # fc2 output features
N_PAD = 128              # lane-dense output width
NEG_BIG = -1e30          # bias for padded output lanes (vanishes in softmax)


def _round_up(x, m):
    return (x + m - 1) // m * m


def mlp_kernel(x_ref, w1_ref, b1_ref, w2_ref, b2_ref, o_ref):
    # Hoist bias reads once (avoid re-materializing broadcasts).
    b1 = b1_ref[...]                                   # (1, 128) f32
    b2 = b2_ref[...]                                   # (1, 128) f32, pads = -1e30

    # fc1 (bf16 MXU inputs, f32 accumulate) + bias + relu in f32.
    h = jnp.dot(x_ref[...], w1_ref[...], preferred_element_type=jnp.float32)
    h = jnp.maximum(h + b1, 0.0)

    # fc2 (bf16 MXU inputs, f32 accumulate) + bias.
    logits = jnp.dot(h.astype(w2_ref.dtype), w2_ref[...],
                     preferred_element_type=jnp.float32)
    logits = logits + b2                               # pad lanes -> ~-1e30

    # Numerically stable log_softmax over the last axis (pad lanes contribute
    # exp(-huge) == 0 to the sum and never win the max).
    m = jnp.max(logits, axis=-1, keepdims=True)
    shifted = logits - m
    lse = jnp.log(jnp.sum(jnp.exp(shifted), axis=-1, keepdims=True))
    o_ref[...] = shifted - lse


@functools.partial(jax.jit, static_argnames=("block_m",))
def net_forward(x_nchw, w1, b1, w2, b2, *, block_m=512):
    """x_nchw: (B, 1, 28, 28) float32 -> (B, 10) log-probabilities.

    w1: (896, 128) bf16 (zero-padded rows 784:896)
    b1: (1, 128)   f32
    w2: (128, 128) bf16 (zero-padded cols 10:128)
    b2: (1, 128)   f32  (cols 10:128 == -1e30)
    """
    B = x_nchw.shape[0]
    x_flat = x_nchw.reshape(B, -1).astype(jnp.float32)     # torch.flatten(x, 1)

    # Pad K 784 -> 896 with zeros and batch up to a full tile.
    tm = min(block_m, _round_up(B, 8))
    tm = _round_up(tm, 8)
    b_pad = _round_up(B, tm)
    x_padded = jnp.pad(x_flat, ((0, b_pad - B), (0, K_PAD - K_LOGICAL)))
    x_bf16 = x_padded.astype(jnp.bfloat16)

    grid = (b_pad // tm,)
    flops = 2 * b_pad * K_PAD * H_DIM + 2 * b_pad * H_DIM * N_PAD
    bytes_accessed = (x_bf16.size * 2 + w1.size * 2 + w2.size * 2
                      + b1.size * 4 + b2.size * 4 + b_pad * N_PAD * 4)

    out = pl.pallas_call(
        mlp_kernel,
        out_shape=jax.ShapeDtypeStruct((b_pad, N_PAD), jnp.float32),
        grid=grid,
        in_specs=[
            pl.BlockSpec((tm, K_PAD), lambda i: (i, 0)),        # x tile (streamed)
            pl.BlockSpec((K_PAD, H_DIM), lambda i: (0, 0)),     # w1 (resident)
            pl.BlockSpec((1, H_DIM), lambda i: (0, 0)),         # b1 (resident)
            pl.BlockSpec((H_DIM, N_PAD), lambda i: (0, 0)),     # w2 (resident)
            pl.BlockSpec((1, N_PAD), lambda i: (0, 0)),         # b2 (resident)
        ],
        out_specs=pl.BlockSpec((tm, N_PAD), lambda i: (i, 0)),
        compiler_params=pltpu.CompilerParams(
            dimension_semantics=("parallel",),
        ),
        cost_estimate=pl.CostEstimate(
            flops=flops,
            transcendentals=b_pad * (N_PAD + 1),
            bytes_accessed=bytes_accessed,
        ),
    )(x_bf16, w1, b1, w2, b2)

    # Drop padded batch rows and padded output lanes.
    return out[:B, :N_LOGICAL]


def init_params(key):
    """PyTorch-default-style init, returned in the padded kernel layout."""
    k1, k2, k3, k4 = jax.random.split(key, 4)
    lim1 = 1.0 / jnp.sqrt(float(K_LOGICAL))
    lim2 = 1.0 / jnp.sqrt(float(H_DIM))
    # Logical (in, out) weights — equivalent to nn.Linear weight.T.
    w1 = jax.random.uniform(k1, (K_LOGICAL, H_DIM), jnp.float32, -lim1, lim1)
    b1 = jax.random.uniform(k2, (H_DIM,), jnp.float32, -lim1, lim1)
    w2 = jax.random.uniform(k3, (H_DIM, N_LOGICAL), jnp.float32, -lim2, lim2)
    b2 = jax.random.uniform(k4, (N_LOGICAL,), jnp.float32, -lim2, lim2)
    return w1, b1, w2, b2


def prepare_params(w1, b1, w2, b2):
    """Pad / cast logical params into the kernel layout."""
    w1_p = jnp.pad(w1, ((0, K_PAD - K_LOGICAL), (0, 0))).astype(jnp.bfloat16)
    b1_p = b1.reshape(1, H_DIM).astype(jnp.float32)
    w2_p = jnp.pad(w2, ((0, 0), (0, N_PAD - N_LOGICAL))).astype(jnp.bfloat16)
    b2_p = jnp.full((1, N_PAD), NEG_BIG, dtype=jnp.float32)
    b2_p = b2_p.at[0, :N_LOGICAL].set(b2.astype(jnp.float32))
    return w1_p, b1_p, w2_p, b2_p


def reference_forward(x_nchw, w1, b1, w2, b2):
    """Pure-JAX f32 reference of the PyTorch forward."""
    x = x_nchw.reshape(x_nchw.shape[0], -1)
    h = jnp.maximum(x @ w1 + b1, 0.0)
    logits = h @ w2 + b2
    return jax.nn.log_softmax(logits, axis=1)


if __name__ == "__main__":
    key = jax.random.PRNGKey(0)
    k_x, k_p = jax.random.split(key)

    # MNIST-like batch: (B, C, H, W) = (2, 1, 28, 28); 784 fixed by fc1.
    x = jax.random.normal(k_x, (2, 1, 28, 28), dtype=jnp.float32)
    w1, b1, w2, b2 = init_params(k_p)
    w1_p, b1_p, w2_p, b2_p = prepare_params(w1, b1, w2, b2)

    out = net_forward(x, w1_p, b1_p, w2_p, b2_p)
    out = jax.block_until_ready(out)

    assert out.shape == (2, 10)
    # log_softmax rows must exp-sum to 1.
    row_sums = jnp.sum(jnp.exp(out), axis=1)
    assert jnp.allclose(row_sums, 1.0, atol=1e-4), row_sums
    # Match the f32 reference (bf16 MXU inputs -> loose tolerance).
    ref = reference_forward(x, w1, b1, w2, b2)
    assert jnp.allclose(out, ref, atol=1e-1), jnp.max(jnp.abs(out - ref))

    print("KERNEL_OK")
</pallas_src>

<mosaic_0001>
module attributes {stable_mosaic.version = 11 : i64} {
  func.func @mlp_kernel(%arg0: i32, %arg1: memref<8x896xbf16, #tpu.memory_space<vmem>>, %arg2: memref<896x128xbf16, #tpu.memory_space<vmem>>, %arg3: memref<1x128xf32, #tpu.memory_space<vmem>>, %arg4: memref<128x128xbf16, #tpu.memory_space<vmem>>, %arg5: memref<1x128xf32, #tpu.memory_space<vmem>>, %arg6: memref<8x128xf32, #tpu.memory_space<vmem>>) attributes {dimension_semantics = [#tpu.dimension_semantics<parallel>], iteration_bounds = array<i64: 1>, scalar_prefetch = 0 : i64, scratch_operands = 0 : i64, tpu.core_type = #tpu.core_type<tc>, window_params = [{transform_indices = @transform_0, window_bounds = array<i64: 8, 896>}, {pipeline_mode = #tpu.pipeline_mode<synchronous>, transform_indices = @transform_1, window_bounds = array<i64: 896, 128>}, {pipeline_mode = #tpu.pipeline_mode<synchronous>, transform_indices = @transform_2, window_bounds = array<i64: 1, 128>}, {pipeline_mode = #tpu.pipeline_mode<synchronous>, transform_indices = @transform_3, window_bounds = array<i64: 128, 128>}, {pipeline_mode = #tpu.pipeline_mode<synchronous>, transform_indices = @transform_4, window_bounds = array<i64: 1, 128>}, {transform_indices = @transform_5, window_bounds = array<i64: 8, 128>}]} {
    %c0 = arith.constant 0 : index
    %c0_0 = arith.constant 0 : index
    %0 = vector.load %arg3[%c0, %c0_0] : memref<1x128xf32, #tpu.memory_space<vmem>>, vector<1x128xf32>
    %c0_1 = arith.constant 0 : index
    %c0_2 = arith.constant 0 : index
    %1 = vector.load %arg5[%c0_1, %c0_2] : memref<1x128xf32, #tpu.memory_space<vmem>>, vector<1x128xf32>
    %c0_3 = arith.constant 0 : index
    %c0_4 = arith.constant 0 : index
    %2 = vector.load %arg1[%c0_3, %c0_4] : memref<8x896xbf16, #tpu.memory_space<vmem>>, vector<8x896xbf16>
    %c0_5 = arith.constant 0 : index
    %c0_6 = arith.constant 0 : index
    %3 = vector.load %arg2[%c0_5, %c0_6] : memref<896x128xbf16, #tpu.memory_space<vmem>>, vector<896x128xbf16>
    %cst = arith.constant dense<0.000000e+00> : vector<8x128xf32>
    %4 = tpu.matmul %2, %3, %cst {dimension_numbers = #tpu.dot_dimension_numbers<[1], [0], [0], [1], [0, 0, 1, 1], [], []>} : vector<8x896xbf16>, vector<896x128xbf16>, vector<8x128xf32> -> vector<8x128xf32>
    %5 = vector.broadcast %0 : vector<1x128xf32> to vector<8x128xf32>
    %6 = arith.addf %4, %5 : vector<8x128xf32>
    %cst_7 = arith.constant 0.000000e+00 : f32
    %7 = vector.broadcast %cst_7 : f32 to vector<8x128xf32>
    %8 = arith.maximumf %6, %7 : vector<8x128xf32>
    %9 = arith.truncf %8 : vector<8x128xf32> to vector<8x128xbf16>
    %c0_8 = arith.constant 0 : index
    %c0_9 = arith.constant 0 : index
    %10 = vector.load %arg4[%c0_8, %c0_9] : memref<128x128xbf16, #tpu.memory_space<vmem>>, vector<128x128xbf16>
    %cst_10 = arith.constant dense<0.000000e+00> : vector<8x128xf32>
    %11 = tpu.matmul %9, %10, %cst_10 {dimension_numbers = #tpu.dot_dimension_numbers<[1], [0], [0], [1], [0, 0, 1, 1], [], []>} : vector<8x128xbf16>, vector<128x128xbf16>, vector<8x128xf32> -> vector<8x128xf32>
    %12 = vector.broadcast %1 : vector<1x128xf32> to vector<8x128xf32>
    %13 = arith.addf %11, %12 : vector<8x128xf32>
    %cst_11 = arith.constant dense<0xFF800000> : vector<8xf32>
    %14 = vector.multi_reduction <maximumf>, %13, %cst_11 [1] : vector<8x128xf32> to vector<8xf32>
    %15 = vector.shape_cast %14 : vector<8xf32> to vector<8x1xf32>
    %16 = vector.broadcast %15 : vector<8x1xf32> to vector<8x128xf32>
    %17 = arith.subf %13, %16 : vector<8x128xf32>
    %18 = math.exp %17 : vector<8x128xf32>
    %cst_12 = arith.constant dense<0.000000e+00> : vector<8xf32>
    %19 = vector.multi_reduction <add>, %18, %cst_12 [1] : vector<8x128xf32> to vector<8xf32>
    %20 = vector.shape_cast %19 : vector<8xf32> to vector<8x1xf32>
    %21 = math.log %20 : vector<8x1xf32>
    %22 = vector.broadcast %21 : vector<8x1xf32> to vector<8x128xf32>
    %23 = arith.subf %17, %22 : vector<8x128xf32>
    %c0_13 = arith.constant 0 : index
    %c0_14 = arith.constant 0 : index
    %24 = vector.load %arg6[%c0_13, %c0_14] : memref<8x128xf32, #tpu.memory_space<vmem>>, vector<8x128xf32>
    tpu.vector_store %arg6[%c0_13, %c0_14], %23 {strides = array<i32>} : memref<8x128xf32, #tpu.memory_space<vmem>>, vector<8x128xf32>,
    return
  }
  func.func @transform_0(%arg0: i32) -> (i32, i32) {
    %c0_i32 = arith.constant 0 : i32
    %c0_i32_0 = arith.constant 0 : i32
    return %arg0, %c0_i32 : i32, i32
  }
  func.func @transform_1(%arg0: i32) -> (i32, i32) {
    %c0_i32 = arith.constant 0 : i32
    %c0_i32_0 = arith.constant 0 : i32
    %c0_i32_1 = arith.constant 0 : i32
    return %c0_i32, %c0_i32_0 : i32, i32
  }
  func.func @transform_2(%arg0: i32) -> (i32, i32) {
    %c0_i32 = arith.constant 0 : i32
    %c0_i32_0 = arith.constant 0 : i32
    %c0_i32_1 = arith.constant 0 : i32
    return %c0_i32, %c0_i32_0 : i32, i32
  }
  func.func @transform_3(%arg0: i32) -> (i32, i32) {
    %c0_i32 = arith.constant 0 : i32
    %c0_i32_0 = arith.constant 0 : i32
    %c0_i32_1 = arith.constant 0 : i32
    return %c0_i32, %c0_i32_0 : i32, i32
  }
  func.func @transform_4(%arg0: i32) -> (i32, i32) {
    %c0_i32 = arith.constant 0 : i32
    %c0_i32_0 = arith.constant 0 : i32
    %c0_i32_1 = arith.constant 0 : i32
    return %c0_i32, %c0_i32_0 : i32, i32
  }
  func.func @transform_5(%arg0: i32) -> (i32, i32) {
    %c0_i32 = arith.constant 0 : i32
    %c0_i32_0 = arith.constant 0 : i32
    return %arg0, %c0_i32 : i32, i32
  }
}

</mosaic_0001>

<llo_original>
// kernel: net_forward.1
$region0: #{net_forward.1}
  #allocation0 [shape = 'u32[]', space=smem, size = 0x4, offset = 0x4, fixed_abs, tag = 'smem constant byte address 0x4 - core index']
  #allocation1 [shape = 'u32[72,128]{1,0:T(1,128)}', space=vmem, size = 0x9000, scoped, tag = 'internal scratch']
  %s0 = inlined_call_operand.vmem [shape: bf16[8,896], index: 0, kind: input, shape index: {}]
  %s1 = inlined_call_operand.hbm [shape: bf16[896,128], index: 1, kind: input, shape index: {}]
  %s2 = inlined_call_operand.vmem [shape: f32[1,128], index: 2, kind: input, shape index: {}]
  %s3 = inlined_call_operand.vmem [shape: bf16[128,128], index: 3, kind: input, shape index: {}]
  %s4 = inlined_call_operand.vmem [shape: f32[1,128], index: 4, kind: input, shape index: {}]
  %s5 = inlined_call_operand.vmem [shape: f32[8,128], index: 5, kind: output, shape index: {}]
  %s6 = sld [smem:[#allocation0]]
  $region34: #{net_forward.1} parent=0
    _
  %s8 = ssub.s32 1, %s6
  %s9 = scalar_select 0, %s8, %s6
  $region1: #{net_forward.1} parent=0
    #allocation2 [shape = 'u8[229376]{0}', space=vmem, size = 0x38000, scoped, tag = 'input window, operand 1, single buffered']
    #allocation3 [shape = 's32[1]{0}', space=sflag, size = 0x4, scoped, tag = 'scoped memory for net_forward.1']
    %10 = vsyncpa [#allocation3], 0
    // Predicated region
    $region2: #{net_forward.1} parent=1 // pred_check
      _
    $region3: #{net_forward.1} parent=1 // pred_check_branch
      %12 = sbr.rel (0) target = $region5
    $region4: #{net_forward.1} parent=1 // pred_region
      _
    $region5: #{net_forward.1} parent=1 // pred_fallthru
      _
    // Predicated region
    $region6: #{net_forward.1} parent=1 // pred_check
      _
    $region7: #{net_forward.1} parent=1 // pred_check_branch
      %14 = sbr.rel (0) target = $region9
    $region8: #{net_forward.1} parent=1 // pred_region
      %16 = vsyncadd [#allocation3], 0
      %s17 = sshll.u32 %s1, 4
      %s18 = int_to_ptr.hbm [resolvable:$true] %s17
      %s19 = sshll.u32 [#allocation2], 4
      %s20 = int_to_ptr.vmem [resolvable:$true] %s19
      %25 = dma.hbm_to_vmem [thread:$0]  %s18, 7168, %s20, [#allocation3], 64, 64, 4
    $region9: #{net_forward.1} parent=1 // pred_fallthru
      _
    // Predicated region
    $region10: #{net_forward.1} parent=1 // pred_check
      _
    $region11: #{net_forward.1} parent=1 // pred_check_branch
      %27 = sbr.rel (0) target = $region13
    $region12: #{net_forward.1} parent=1 // pred_region
      _
    $region13: #{net_forward.1} parent=1 // pred_fallthru
      _
    // Predicated region
    $region14: #{net_forward.1} parent=1 // pred_check
      _
    $region15: #{net_forward.1} parent=1 // pred_check_branch
      %29 = sbr.rel (0) target = $region17
    $region16: #{net_forward.1} parent=1 // pred_region
      _
    $region17: #{net_forward.1} parent=1 // pred_fallthru
      _
    // Predicated region
    $region18: #{net_forward.1} parent=1 // pred_check
      _
    $region19: #{net_forward.1} parent=1 // pred_check_branch
      %31 = sbr.rel (0) target = $region21
    $region20: #{net_forward.1} parent=1 // pred_region
      _
    $region21: #{net_forward.1} parent=1 // pred_fallthru
      _
    // Predicated region
    $region22: #{net_forward.1} parent=1 // pred_check
      _
    $region23: #{net_forward.1} parent=1 // pred_check_branch
      %33 = sbr.rel (0) target = $region25
    $region24: #{net_forward.1} parent=1 // pred_region
      %35 = dma.done [#allocation3], 7168
    $region25: #{net_forward.1} parent=1 // pred_fallthru
      _
    %v36 = vld [vmem:[%s2] sm:$0x1]
    %v37 = vld [vmem:[%s4] sm:$0x1]
    %v38 = vld [vmem:[%s0] sm:$0xff]
    %v39 = vld [vmem:[%s0 + $0x8] sm:$0xff]
    %v40 = vld [vmem:[%s0 + $0x10] sm:$0xff]
    %v41 = vld [vmem:[%s0 + $0x18] sm:$0xf]
    %v42 = vld [vmem:[#allocation2] sm:$0xf]
    %v43 = vld [vmem:[#allocation2 + $0x4] sm:$0xf]
    %v44 = vld [vmem:[#allocation2 + $0x8] sm:$0xf]
    %v45 = vld [vmem:[#allocation2 + $0xc] sm:$0xf]
    %v46 = vld [vmem:[#allocation2 + $0x10] sm:$0xf]
    %v47 = vld [vmem:[#allocation2 + $0x14] sm:$0xf]
    %v48 = vld [vmem:[#allocation2 + $0x18] sm:$0xf]
    %v49 = vld [vmem:[#allocation2 + $0x1c] sm:$0xf]
    %v50 = vld [vmem:[#allocation2 + $0x20] sm:$0xf]
    %v51 = vld [vmem:[#allocation2 + $0x24] sm:$0xf]
    %v52 = vld [vmem:[#allocation2 + $0x28] sm:$0xf]
    %v53 = vld [vmem:[#allocation2 + $0x2c] sm:$0xf]
    %v54 = vld [vmem:[#allocation2 + $0x30] sm:$0xf]
    %v55 = vld [vmem:[#allocation2 + $0x34] sm:$0xf]
    %v56 = vld [vmem:[#allocation2 + $0x38] sm:$0xf]
    %v57 = vld [vmem:[#allocation2 + $0x3c] sm:$0xf]
    %v58 = vld [vmem:[#allocation2 + $0x40] sm:$0xf]
    %v59 = vld [vmem:[#allocation2 + $0x44] sm:$0xf]
    %v60 = vld [vmem:[#allocation2 + $0x48] sm:$0xf]
    %v61 = vld [vmem:[#allocation2 + $0x4c] sm:$0xf]
    %v62 = vld [vmem:[#allocation2 + $0x50] sm:$0xf]
    %v63 = vld [vmem:[#allocation2 + $0x54] sm:$0xf]
    %v64 = vld [vmem:[#allocation2 + $0x58] sm:$0xf]
    %v65 = vld [vmem:[#allocation2 + $0x5c] sm:$0xf]
    %v66 = vld [vmem:[#allocation2 + $0x60] sm:$0xf]
    %v67 = vld [vmem:[#allocation2 + $0x64] sm:$0xf]
    %v68 = vld [vmem:[#allocation2 + $0x68] sm:$0xf]
    %v69 = vld [vmem:[#allocation2 + $0x6c] sm:$0xf]
    %v70 = vld [vmem:[#allocation2 + $0x70] sm:$0xf]
    %v71 = vld [vmem:[#allocation2 + $0x74] sm:$0xf]
    %v72 = vld [vmem:[#allocation2 + $0x78] sm:$0xf]
    %v73 = vld [vmem:[#allocation2 + $0x7c] sm:$0xf]
    %v74 = vld [vmem:[#allocation2 + $0x80] sm:$0xf]
    %v75 = vld [vmem:[#allocation2 + $0x84] sm:$0xf]
    %v76 = vld [vmem:[#allocation2 + $0x88] sm:$0xf]
    %v77 = vld [vmem:[#allocation2 + $0x8c] sm:$0xf]
    %v78 = vld [vmem:[#allocation2 + $0x90] sm:$0xf]
    %v79 = vld [vmem:[#allocation2 + $0x94] sm:$0xf]
    %v80 = vld [vmem:[#allocation2 + $0x98] sm:$0xf]
    %v81 = vld [vmem:[#allocation2 + $0x9c] sm:$0xf]
    %v82 = vld [vmem:[#allocation2 + $0xa0] sm:$0xf]
    %v83 = vld [vmem:[#allocation2 + $0xa4] sm:$0xf]
    %v84 = vld [vmem:[#allocation2 + $0xa8] sm:$0xf]
    %v85 = vld [vmem:[#allocation2 + $0xac] sm:$0xf]
    %v86 = vld [vmem:[#allocation2 + $0xb0] sm:$0xf]
    %v87 = vld [vmem:[#allocation2 + $0xb4] sm:$0xf]
    %v88 = vld [vmem:[#allocation2 + $0xb8] sm:$0xf]
    %v89 = vld [vmem:[#allocation2 + $0xbc] sm:$0xf]
    %v90 = vld [vmem:[#allocation2 + $0xc0] sm:$0xf]
    %v91 = vld [vmem:[#allocation2 + $0xc4] sm:$0xf]
    %v92 = vld [vmem:[#allocation2 + $0xc8] sm:$0xf]
    %v93 = vld [vmem:[#allocation2 + $0xcc] sm:$0xf]
    %v94 = vld [vmem:[#allocation2 + $0xd0] sm:$0xf]
    %v95 = vld [vmem:[#allocation2 + $0xd4] sm:$0xf]
    %v96 = vld [vmem:[#allocation2 + $0xd8] sm:$0xf]
    %v97 = vld [vmem:[#allocation2 + $0xdc] sm:$0xf]
    %v98 = vld [vmem:[#allocation2 + $0xe0] sm:$0xf]
    %v99 = vld [vmem:[#allocation2 + $0xe4] sm:$0xf]
    %v100 = vld [vmem:[#allocation2 + $0xe8] sm:$0xf]
    %v101 = vld [vmem:[#allocation2 + $0xec] sm:$0xf]
    %v102 = vld [vmem:[#allocation2 + $0xf0] sm:$0xf]
    %v103 = vld [vmem:[#allocation2 + $0xf4] sm:$0xf]
    %v104 = vld [vmem:[#allocation2 + $0xf8] sm:$0xf]
    %v105 = vld [vmem:[#allocation2 + $0xfc] sm:$0xf]
    %v106 = vld [vmem:[#allocation2 + $0x100] sm:$0xf]
    %v107 = vld [vmem:[#allocation2 + $0x104] sm:$0xf]
    %v108 = vld [vmem:[#allocation2 + $0x108] sm:$0xf]
    %v109 = vld [vmem:[#allocation2 + $0x10c] sm:$0xf]
    %v110 = vld [vmem:[#allocation2 + $0x110] sm:$0xf]
    %v111 = vld [vmem:[#allocation2 + $0x114] sm:$0xf]
    %v112 = vld [vmem:[#allocation2 + $0x118] sm:$0xf]
    %v113 = vld [vmem:[#allocation2 + $0x11c] sm:$0xf]
    %v114 = vld [vmem:[#allocation2 + $0x120] sm:$0xf]
    %v115 = vld [vmem:[#allocation2 + $0x124] sm:$0xf]
    %v116 = vld [vmem:[#allocation2 + $0x128] sm:$0xf]
    %v117 = vld [vmem:[#allocation2 + $0x12c] sm:$0xf]
    %v118 = vld [vmem:[#allocation2 + $0x130] sm:$0xf]
    %v119 = vld [vmem:[#allocation2 + $0x134] sm:$0xf]
    %v120 = vld [vmem:[#allocation2 + $0x138] sm:$0xf]
    %v121 = vld [vmem:[#allocation2 + $0x13c] sm:$0xf]
    %v122 = vld [vmem:[#allocation2 + $0x140] sm:$0xf]
    %v123 = vld [vmem:[#allocation2 + $0x144] sm:$0xf]
    %v124 = vld [vmem:[#allocation2 + $0x148] sm:$0xf]
    %v125 = vld [vmem:[#allocation2 + $0x14c] sm:$0xf]
    %v126 = vld [vmem:[#allocation2 + $0x150] sm:$0xf]
    %v127 = vld [vmem:[#allocation2 + $0x154] sm:$0xf]
    %v128 = vld [vmem:[#allocation2 + $0x158] sm:$0xf]
    %v129 = vld [vmem:[#allocation2 + $0x15c] sm:$0xf]
    %v130 = vld [vmem:[#allocation2 + $0x160] sm:$0xf]
    %v131 = vld [vmem:[#allocation2 + $0x164] sm:$0xf]
    %v132 = vld [vmem:[#allocation2 + $0x168] sm:$0xf]
    %v133 = vld [vmem:[#allocation2 + $0x16c] sm:$0xf]
    %v134 = vld [vmem:[#allocation2 + $0x170] sm:$0xf]
    %v135 = vld [vmem:[#allocation2 + $0x174] sm:$0xf]
    %v136 = vld [vmem:[#allocation2 + $0x178] sm:$0xf]
    %v137 = vld [vmem:[#allocation2 + $0x17c] sm:$0xf]
    %v138 = vld [vmem:[#allocation2 + $0x180] sm:$0xf]
    %v139 = vld [vmem:[#allocation2 + $0x184] sm:$0xf]
    %v140 = vld [vmem:[#allocation2 + $0x188] sm:$0xf]
    %v141 = vld [vmem:[#allocation2 + $0x18c] sm:$0xf]
    %v142 = vld [vmem:[#allocation2 + $0x190] sm:$0xf]
    %v143 = vld [vmem:[#allocation2 + $0x194] sm:$0xf]
    %v144 = vld [vmem:[#allocation2 + $0x198] sm:$0xf]
    %v145 = vld [vmem:[#allocation2 + $0x19c] sm:$0xf]
    %v146 = vld [vmem:[#allocation2 + $0x1a0] sm:$0xf]
    %v147 = vld [vmem:[#allocation2 + $0x1a4] sm:$0xf]
    %v148 = vld [vmem:[#allocation2 + $0x1a8] sm:$0xf]
    %v149 = vld [vmem:[#allocation2 + $0x1ac] sm:$0xf]
    %v150 = vld [vmem:[#allocation2 + $0x1b0] sm:$0xf]
    %v151 = vld [vmem:[#allocation2 + $0x1b4] sm:$0xf]
    %v152 = vld [vmem:[#allocation2 + $0x1b8] sm:$0xf]
    %v153 = vld [vmem:[#allocation2 + $0x1bc] sm:$0xf]
    %v155 = vperm.slane %v36, 0
    %v161 = vunpack.c.l.b16 %v38
    %v162 = vunpack.c.h.b16 %v38
    %v163 = vunpack.c.l.b16 %v39
    %v164 = vunpack.c.h.b16 %v39
    %v165 = vunpack.c.l.b16 %v40
    %v166 = vunpack.c.h.b16 %v40
    %v167 = vunpack.c.l.b16 %v41
    %v168 = vpack.c.b16 %v161, %v161
    %v169 = vpack.c.b16 %v162, %v162
    %v170 = vpack.c.b16 %v163, %v163
    %v171 = vpack.c.b16 %v164, %v164
    %v172 = vpack.c.b16 %v165, %v165
    %v173 = vpack.c.b16 %v166, %v166
    %v174 = vpack.c.b16 %v167, %v167
    %v294 = vunpack.c.l.b16 %v42
    %v295 = vunpack.c.l.b16 %v43
    %v296 = vunpack.c.l.b16 %v44
    %v297 = vunpack.c.l.b16 %v45
    %v298 = vunpack.c.l.b16 %v46
    %v299 = vunpack.c.l.b16 %v47
    %v300 = vunpack.c.l.b16 %v48
    %v301 = vunpack.c.l.b16 %v49
    %v302 = vunpack.c.l.b16 %v50
    %v303 = vunpack.c.l.b16 %v51
    %v304 = vunpack.c.l.b16 %v52
    %v305 = vunpack.c.l.b16 %v53
    %v306 = vunpack.c.l.b16 %v54
    %v307 = vunpack.c.l.b16 %v55
    %v308 = vunpack.c.l.b16 %v56
    %v309 = vunpack.c.l.b16 %v57
    %v310 = vunpack.c.l.b16 %v58
    %v311 = vunpack.c.l.b16 %v59
    %v312 = vunpack.c.l.b16 %v60
    %v313 = vunpack.c.l.b16 %v61
    %v314 = vunpack.c.l.b16 %v62
    %v315 = vunpack.c.l.b16 %v63
    %v316 = vunpack.c.l.b16 %v64
    %v317 = vunpack.c.l.b16 %v65
    %v318 = vunpack.c.l.b16 %v66
    %v319 = vunpack.c.l.b16 %v67
    %v320 = vunpack.c.l.b16 %v68
    %v321 = vunpack.c.l.b16 %v69
    %v322 = vunpack.c.l.b16 %v70
    %v323 = vunpack.c.l.b16 %v71
    %v324 = vunpack.c.l.b16 %v72
    %v325 = vunpack.c.l.b16 %v73
    %v326 = vunpack.c.l.b16 %v74
    %v327 = vunpack.c.l.b16 %v75
    %v328 = vunpack.c.l.b16 %v76
    %v329 = vunpack.c.l.b16 %v77
    %v330 = vunpack.c.l.b16 %v78
    %v331 = vunpack.c.l.b16 %v79
    %v332 = vunpack.c.l.b16 %v80
    %v333 = vunpack.c.l.b16 %v81
    %v334 = vunpack.c.l.b16 %v82
    %v335 = vunpack.c.l.b16 %v83
    %v336 = vunpack.c.l.b16 %v84
    %v337 = vunpack.c.l.b16 %v85
    %v338 = vunpack.c.l.b16 %v86
    %v339 = vunpack.c.l.b16 %v87
    %v340 = vunpack.c.l.b16 %v88
    %v341 = vunpack.c.l.b16 %v89
    %v342 = vunpack.c.l.b16 %v90
    %v343 = vunpack.c.l.b16 %v91
    %v344 = vunpack.c.l.b16 %v92
    %v345 = vunpack.c.l.b16 %v93
    %v346 = vunpack.c.l.b16 %v94
    %v347 = vunpack.c.l.b16 %v95
    %v348 = vunpack.c.l.b16 %v96
    %v349 = vunpack.c.l.b16 %v97
    %v350 = vunpack.c.l.b16 %v98
    %v351 = vunpack.c.l.b16 %v99
    %v352 = vunpack.c.l.b16 %v100
    %v353 = vunpack.c.l.b16 %v101
    %v354 = vunpack.c.l.b16 %v102
    %v355 = vunpack.c.l.b16 %v103
    %v356 = vunpack.c.l.b16 %v104
    %v357 = vunpack.c.l.b16 %v105
    %v358 = vunpack.c.l.b16 %v106
    %v359 = vunpack.c.l.b16 %v107
    %v360 = vunpack.c.l.b16 %v108
    %v361 = vunpack.c.l.b16 %v109
    %v362 = vunpack.c.l.b16 %v110
    %v363 = vunpack.c.l.b16 %v111
    %v364 = vunpack.c.l.b16 %v112
    %v365 = vunpack.c.l.b16 %v113
    %v366 = vunpack.c.l.b16 %v114
    %v367 = vunpack.c.l.b16 %v115
    %v368 = vunpack.c.l.b16 %v116
    %v369 = vunpack.c.l.b16 %v117
    %v370 = vunpack.c.l.b16 %v118
    %v371 = vunpack.c.l.b16 %v119
    %v372 = vunpack.c.l.b16 %v120
    %v373 = vunpack.c.l.b16 %v121
    %v374 = vunpack.c.l.b16 %v122
    %v375 = vunpack.c.l.b16 %v123
    %v376 = vunpack.c.l.b16 %v124
    %v377 = vunpack.c.l.b16 %v125
    %v378 = vunpack.c.l.b16 %v126
    %v379 = vunpack.c.l.b16 %v127
    %v380 = vunpack.c.l.b16 %v128
    %v381 = vunpack.c.l.b16 %v129
    %v382 = vunpack.c.l.b16 %v130
    %v383 = vunpack.c.l.b16 %v131
    %v384 = vunpack.c.l.b16 %v132
    %v385 = vunpack.c.l.b16 %v133
    %v386 = vunpack.c.l.b16 %v134
    %v387 = vunpack.c.l.b16 %v135
    %v388 = vunpack.c.l.b16 %v136
    %v389 = vunpack.c.l.b16 %v137
    %v390 = vunpack.c.l.b16 %v138
    %v391 = vunpack.c.l.b16 %v139
    %v392 = vunpack.c.l.b16 %v140
    %v393 = vunpack.c.l.b16 %v141
    %v394 = vunpack.c.l.b16 %v142
    %v395 = vunpack.c.l.b16 %v143
    %v396 = vunpack.c.l.b16 %v144
    %v397 = vunpack.c.l.b16 %v145
    %v398 = vunpack.c.l.b16 %v146
    %v399 = vunpack.c.l.b16 %v147
    %v400 = vunpack.c.l.b16 %v148
    %v401 = vunpack.c.l.b16 %v149
    %v402 = vunpack.c.l.b16 %v150
    %v403 = vunpack.c.l.b16 %v151
    %v404 = vunpack.c.l.b16 %v152
    %v405 = vunpack.c.l.b16 %v153
    %v406 = vpack.c.b16 %v295, %v294
    %v407 = vpack.c.b16 %v297, %v296
    %v408 = vpack.c.b16 %v299, %v298
    %v409 = vpack.c.b16 %v301, %v300
    %v410 = vpack.c.b16 %v303, %v302
    %v411 = vpack.c.b16 %v305, %v304
    %v412 = vpack.c.b16 %v307, %v306
    %v413 = vpack.c.b16 %v309, %v308
    %v414 = vpack.c.b16 %v311, %v310
    %v415 = vpack.c.b16 %v313, %v312
    %v416 = vpack.c.b16 %v315, %v314
    %v417 = vpack.c.b16 %v317, %v316
    %v418 = vpack.c.b16 %v319, %v318
    %v419 = vpack.c.b16 %v321, %v320
    %v420 = vpack.c.b16 %v323, %v322
    %v421 = vpack.c.b16 %v325, %v324
    %v422 = vpack.c.b16 %v327, %v326
    %v423 = vpack.c.b16 %v329, %v328
    %v424 = vpack.c.b16 %v331, %v330
    %v425 = vpack.c.b16 %v333, %v332
    %v426 = vpack.c.b16 %v335, %v334
    %v427 = vpack.c.b16 %v337, %v336
    %v428 = vpack.c.b16 %v339, %v338
    %v429 = vpack.c.b16 %v341, %v340
    %v430 = vpack.c.b16 %v343, %v342
    %v431 = vpack.c.b16 %v345, %v344
    %v432 = vpack.c.b16 %v347, %v346
    %v433 = vpack.c.b16 %v349, %v348
    %v434 = vpack.c.b16 %v351, %v350
    %v435 = vpack.c.b16 %v353, %v352
    %v436 = vpack.c.b16 %v355, %v354
    %v437 = vpack.c.b16 %v357, %v356
    %v438 = vpack.c.b16 %v359, %v358
    %v439 = vpack.c.b16 %v361, %v360
    %v440 = vpack.c.b16 %v363, %v362
    %v441 = vpack.c.b16 %v365, %v364
    %v442 = vpack.c.b16 %v367, %v366
    %v443 = vpack.c.b16 %v369, %v368
    %v444 = vpack.c.b16 %v371, %v370
    %v445 = vpack.c.b16 %v373, %v372
    %v446 = vpack.c.b16 %v375, %v374
    %v447 = vpack.c.b16 %v377, %v376
    %v448 = vpack.c.b16 %v379, %v378
    %v449 = vpack.c.b16 %v381, %v380
    %v450 = vpack.c.b16 %v383, %v382
    %v451 = vpack.c.b16 %v385, %v384
    %v452 = vpack.c.b16 %v387, %v386
    %v453 = vpack.c.b16 %v389, %v388
    %v454 = vpack.c.b16 %v391, %v390
    %v455 = vpack.c.b16 %v393, %v392
    %v456 = vpack.c.b16 %v395, %v394
    %v457 = vpack.c.b16 %v397, %v396
    %v458 = vpack.c.b16 %v399, %v398
    %v459 = vpack.c.b16 %v401, %v400
    %v460 = vpack.c.b16 %v403, %v402
    %v461 = vpack.c.b16 %v405, %v404
    %518 = vmatpush.bf16.msra.mxu0 %v413
    %519 = vmatpush.bf16.msra.mxu0 %v412
    %520 = vmatpush.bf16.msra.mxu0 %v411
    %521 = vmatpush.bf16.msra.mxu0 %v410
    %522 = vmatpush.bf16.msra.mxu0 %v409
    %523 = vmatpush.bf16.msra.mxu0 %v408
    %524 = vmatpush.bf16.msra.mxu0 %v407
    %525 = vmatpush.bf16.msra.mxu0 %v406
    %526 = vmatmul.bf16.gmra.mxu0 %v168
    %v527 = vpop.f32.mrf.mxu0
    %v528 = vadd.f32 %v155, %v527
    %v529 = vpop.f32.mrf.mxu0
    %530 = vdwg.mxu0
    %531 = vmatpush.bf16.msra.mxu0 %v421
    %532 = vmatpush.bf16.msra.mxu0 %v420
    %533 = vmatpush.bf16.msra.mxu0 %v419
    %534 = vmatpush.bf16.msra.mxu0 %v418
    %535 = vmatpush.bf16.msra.mxu0 %v417
    %536 = vmatpush.bf16.msra.mxu0 %v416
    %537 = vmatpush.bf16.msra.mxu0 %v415
    %538 = vmatpush.bf16.msra.mxu0 %v414
    %539 = vmatmul.bf16.gmra.mxu0 %v169
    %v540 = vpop.f32.mrf.mxu0
    %v541 = vadd.f32 %v528, %v540
    %v542 = vpop.f32.mrf.mxu0
    %543 = vdwg.mxu0
    %544 = vmatpush.bf16.msra.mxu0 %v429
    %545 = vmatpush.bf16.msra.mxu0 %v428
    %546 = vmatpush.bf16.msra.mxu0 %v427
    %547 = vmatpush.bf16.msra.mxu0 %v426
    %548 = vmatpush.bf16.msra.mxu0 %v425
    %549 = vmatpush.bf16.msra.mxu0 %v424
    %550 = vmatpush.bf16.msra.mxu0 %v423
    %551 = vmatpush.bf16.msra.mxu0 %v422
    %552 = vmatmul.bf16.gmra.mxu0 %v170
    %v553 = vpop.f32.mrf.mxu0
    %v554 = vadd.f32 %v541, %v553
    %v555 = vpop.f32.mrf.mxu0
    %556 = vdwg.mxu0
    %557 = vmatpush.bf16.msra.mxu0 %v437
    %558 = vmatpush.bf16.msra.mxu0 %v436
    %559 = vmatpush.bf16.msra.mxu0 %v435
    %560 = vmatpush.bf16.msra.mxu0 %v434
    %561 = vmatpush.bf16.msra.mxu0 %v433
    %562 = vmatpush.bf16.msra.mxu0 %v432
    %563 = vmatpush.bf16.msra.mxu0 %v431
    %564 = vmatpush.bf16.msra.mxu0 %v430
    %565 = vmatmul.bf16.gmra.mxu0 %v171
    %v566 = vpop.f32.mrf.mxu0
    %v567 = vadd.f32 %v554, %v566
    %v568 = vpop.f32.mrf.mxu0
    %569 = vdwg.mxu0
    %570 = vmatpush.bf16.msra.mxu0 %v445
    %571 = vmatpush.bf16.msra.mxu0 %v444
    %572 = vmatpush.bf16.msra.mxu0 %v443
    %573 = vmatpush.bf16.msra.mxu0 %v442
    %574 = vmatpush.bf16.msra.mxu0 %v441
    %575 = vmatpush.bf16.msra.mxu0 %v440
    %576 = vmatpush.bf16.msra.mxu0 %v439
    %577 = vmatpush.bf16.msra.mxu0 %v438
    %578 = vmatmul.bf16.gmra.mxu0 %v172
    %v579 = vpop.f32.mrf.mxu0
    %v580 = vadd.f32 %v567, %v579
    %v581 = vpop.f32.mrf.mxu0
    %582 = vdwg.mxu0
    %583 = vmatpush.bf16.msra.mxu0 %v453
    %584 = vmatpush.bf16.msra.mxu0 %v452
    %585 = vmatpush.bf16.msra.mxu0 %v451
    %586 = vmatpush.bf16.msra.mxu0 %v450
    %587 = vmatpush.bf16.msra.mxu0 %v449
    %588 = vmatpush.bf16.msra.mxu0 %v448
    %589 = vmatpush.bf16.msra.mxu0 %v447
    %590 = vmatpush.bf16.msra.mxu0 %v446
    %591 = vmatmul.bf16.gmra.mxu0 %v173
    %v592 = vpop.f32.mrf.mxu0
    %v593 = vadd.f32 %v580, %v592
    %v594 = vpop.f32.mrf.mxu0
    %595 = vdwg.mxu0
    %596 = vmatpush.bf16.msra.mxu0 %v461
    %597 = vmatpush.bf16.msra.mxu0 %v460
    %598 = vmatpush.bf16.msra.mxu0 %v459
    %599 = vmatpush.bf16.msra.mxu0 %v458
    %600 = vmatpush.bf16.msra.mxu0 %v457
    %601 = vmatpush.bf16.msra.mxu0 %v456
    %602 = vmatpush.bf16.msra.mxu0 %v455
    %603 = vmatpush.bf16.msra.mxu0 %v454
    %604 = vmatmul.bf16.gmra.mxu0 %v174
    %v605 = vpop.f32.mrf.mxu0
    %v606 = vadd.f32 %v593, %v605
    %v607 = vpop.f32.mrf.mxu0
    %608 = vdwg.mxu0
    %v609 = vmax.f32 %v606, 0.0
    %v610 = vpack.c.bf16 %v609, %v609
    %v611 = vld [vmem:[%s3] sm:$0xf]
    %v612 = vld [vmem:[%s3 + $0x4] sm:$0xf]
    %v613 = vld [vmem:[%s3 + $0x8] sm:$0xf]
    %v614 = vld [vmem:[%s3 + $0xc] sm:$0xf]
    %v615 = vld [vmem:[%s3 + $0x10] sm:$0xf]
    %v616 = vld [vmem:[%s3 + $0x14] sm:$0xf]
    %v617 = vld [vmem:[%s3 + $0x18] sm:$0xf]
    %v618 = vld [vmem:[%s3 + $0x1c] sm:$0xf]
    %v619 = vld [vmem:[%s3 + $0x20] sm:$0xf]
    %v620 = vld [vmem:[%s3 + $0x24] sm:$0xf]
    %v621 = vld [vmem:[%s3 + $0x28] sm:$0xf]
    %v622 = vld [vmem:[%s3 + $0x2c] sm:$0xf]
    %v623 = vld [vmem:[%s3 + $0x30] sm:$0xf]
    %v624 = vld [vmem:[%s3 + $0x34] sm:$0xf]
    %v625 = vld [vmem:[%s3 + $0x38] sm:$0xf]
    %v626 = vld [vmem:[%s3 + $0x3c] sm:$0xf]
    %v628 = vperm.slane %v37, 0
    %v646 = vunpack.c.l.b16 %v611
    %v647 = vunpack.c.l.b16 %v612
    %v648 = vunpack.c.l.b16 %v613
    %v649 = vunpack.c.l.b16 %v614
    %v650 = vunpack.c.l.b16 %v615
    %v651 = vunpack.c.l.b16 %v616
    %v652 = vunpack.c.l.b16 %v617
    %v653 = vunpack.c.l.b16 %v618
    %v654 = vunpack.c.l.b16 %v619
    %v655 = vunpack.c.l.b16 %v620
    %v656 = vunpack.c.l.b16 %v621
    %v657 = vunpack.c.l.b16 %v622
    %v658 = vunpack.c.l.b16 %v623
    %v659 = vunpack.c.l.b16 %v624
    %v660 = vunpack.c.l.b16 %v625
    %v661 = vunpack.c.l.b16 %v626
    %v662 = vpack.c.b16 %v647, %v646
    %v663 = vpack.c.b16 %v649, %v648
    %v664 = vpack.c.b16 %v651, %v650
    %v665 = vpack.c.b16 %v653, %v652
    %v666 = vpack.c.b16 %v655, %v654
    %v667 = vpack.c.b16 %v657, %v656
    %v668 = vpack.c.b16 %v659, %v658
    %v669 = vpack.c.b16 %v661, %v660
    %678 = vmatpush.bf16.msra.mxu0 %v669
    %679 = vmatpush.bf16.msra.mxu0 %v668
    %680 = vmatpush.bf16.msra.mxu0 %v667
    %681 = vmatpush.bf16.msra.mxu0 %v666
    %682 = vmatpush.bf16.msra.mxu0 %v665
    %683 = vmatpush.bf16.msra.mxu0 %v664
    %684 = vmatpush.bf16.msra.mxu0 %v663
    %685 = vmatpush.bf16.msra.mxu0 %v662
    %686 = vmatmul.bf16.gmra.mxu0 %v610
    %v687 = vpop.f32.mrf.mxu0
    %v688 = vadd.f32 %v628, %v687
    %v689 = vpop.f32.mrf.mxu0
    %690 = vdwg.mxu0
    %691 = vmax.xlane.f32.xlu0 %v688
    %v692 = vpop.xlane.xlu0 %691
    %v693 = vsub.f32 %v688, %v692
    %v694 = vmul.f32 %v693, 1.442695
    %v695 = vpow.pop %v694
    %696 = vadd.xlane.f32.xlu0 %v695
    %v697 = vpop.xlane.xlu0 %696
    %v698 = vlog2.pop %v697
    %v699 = vmul.f32 %v698, 0.6931472
    %v700 = vsub.f32 %v693, %v699
    %701 = vst [vmem:[%s5] sm:$0xff] %v700
    // Predicated region
    $region26: #{net_forward.1} parent=1 // pred_check
      _
    $region27: #{net_forward.1} parent=1 // pred_check_branch
      %703 = sbr.rel (0) target = $region29
    $region28: #{net_forward.1} parent=1 // pred_region
      _
    $region29: #{net_forward.1} parent=1 // pred_fallthru
      _
    // Predicated region
    $region30: #{net_forward.1} parent=1 // pred_check
      _
    $region31: #{net_forward.1} parent=1 // pred_check_branch
      %705 = sbr.rel (0) target = $region33
    $region32: #{net_forward.1} parent=1 // pred_region
      _
    $region33: #{net_forward.1} parent=1 // pred_fallthru
      _
    %706 = vsyncpa [#allocation3], 1

</llo_original>
